<compile_context>
chip_gen: v7x
topology: tpu7x:2x2x1
jax: 0.10.0
libtpu: 0.0.40
codegen_flags: <defaults>
</compile_context>

<pallas_src>
import functools

import jax
import jax.numpy as jnp
from jax.experimental import pallas as pl
from jax.experimental.pallas import tpu as pltpu


def _round_up(x, m):
    return (x + m - 1) // m * m


def _pad_cast_2d(a, rows, cols, dtype):
    """Zero-pad `a` to (rows, cols) and cast to `dtype`; no-op if already matching."""
    if a.shape == (rows, cols) and a.dtype == dtype:
        return a
    out = jnp.zeros((rows, cols), dtype)
    return out.at[: a.shape[0], : a.shape[1]].set(a.astype(dtype))


def _mlp_kernel(x_ref, w1_ref, b1_ref, w2_ref, b2_ref, w3_ref, b3_ref,
                o_ref, h1_acc):
    """Grid = (batch tiles, fc1 K tiles).  fc1 accumulated across K; fc2/out fused
    into the last K step.  Matmul inputs bf16, accumulation and VPU math f32."""
    k = pl.program_id(1)

    @pl.when(k == 0)
    def _():
        h1_acc[...] = jnp.zeros_like(h1_acc)

    # Partial fc1 contribution for this K slab (MXU, f32 accumulate).
    h1_acc[...] += jnp.dot(x_ref[...], w1_ref[...],
                           preferred_element_type=jnp.float32)

    @pl.when(k == pl.num_programs(1) - 1)
    def _():
        # Bias + ReLU in f32 (portable across v5e/v6e/v7x VPUs).
        h1 = jnp.maximum(h1_acc[...] + b1_ref[...], 0.0)
        # fc2 + ReLU
        h2 = jnp.dot(h1.astype(w2_ref.dtype), w2_ref[...],
                     preferred_element_type=jnp.float32)
        h2 = jnp.maximum(h2 + b2_ref[...], 0.0)
        # out (no activation); lane-dense (padded-to-128) store
        o = jnp.dot(h2.astype(w3_ref.dtype), w3_ref[...],
                    preferred_element_type=jnp.float32)
        o_ref[...] = (o + b3_ref[...]).astype(o_ref.dtype)


@functools.partial(jax.jit, static_argnames=("k_tile", "max_block_b"))
def convnet_forward(x, w1_t, b1, w2_t, b2, w3_t, b3, *,
                    k_tile=2048, max_block_b=256):
    """Fused MLP forward. x: (B, stateDim) f32. Returns (B, outputSize) f32."""
    B, d_in = x.shape
    d_h1 = w1_t.shape[1]
    d_h2 = w2_t.shape[1]
    d_out = w3_t.shape[1]

    # ---- padded / tiled sizes (lane- and MXU-friendly) ----
    d_in_128 = _round_up(d_in, 128)
    tk = min(_round_up(k_tile, 128), d_in_128)   # fc1 K-slab width (multiple of 128)
    d_in_p = _round_up(d_in_128, tk)
    d_h1_p = _round_up(d_h1, 128)
    d_h2_p = _round_up(d_h2, 128)
    d_out_p = _round_up(d_out, 128)              # lane-dense output stores

    if B <= max_block_b:
        block_b = _round_up(B, 16)               # bf16 sublane packing
        B_p = block_b
    else:
        block_b = max_block_b
        B_p = _round_up(B, block_b)

    # ---- cast + zero-pad operands (zeros are exact no-ops through the MLP).
    # Pass-through when already aligned: no extra HBM copies. ----
    bf = jnp.bfloat16
    xp = _pad_cast_2d(x, B_p, d_in_p, bf)
    w1p = _pad_cast_2d(w1_t, d_in_p, d_h1_p, bf)
    w2p = _pad_cast_2d(w2_t, d_h1_p, d_h2_p, bf)
    w3p = _pad_cast_2d(w3_t, d_h2_p, d_out_p, bf)
    b1p = _pad_cast_2d(b1.reshape(1, -1), 1, d_h1_p, jnp.float32)
    b2p = _pad_cast_2d(b2.reshape(1, -1), 1, d_h2_p, jnp.float32)
    b3p = _pad_cast_2d(b3.reshape(1, -1), 1, d_out_p, jnp.float32)

    grid = (B_p // block_b, d_in_p // tk)        # reduction (K) axis last

    # Constant-index blocks: one VMEM copy is enough (no re-fetch, no double buffer).
    resident = dict(pipeline_mode=pl.Buffered(1))

    flops = 2 * B_p * (d_in_p * d_h1_p + d_h1_p * d_h2_p + d_h2_p * d_out_p)
    bytes_accessed = (
        B_p * d_in_p * 2
        + d_in_p * d_h1_p * 2 + d_h1_p * d_h2_p * 2 + d_h2_p * d_out_p * 2
        + (d_h1_p + d_h2_p + d_out_p) * 4
        + B_p * d_out_p * 4)

    out = pl.pallas_call(
        _mlp_kernel,
        out_shape=jax.ShapeDtypeStruct((B_p, d_out_p), jnp.float32),
        grid_spec=pltpu.PrefetchScalarGridSpec(
            num_scalar_prefetch=0,
            grid=grid,
            in_specs=[
                pl.BlockSpec((block_b, tk), lambda i, k: (i, k)),            # x tile
                pl.BlockSpec((tk, d_h1_p), lambda i, k: (k, 0)),             # W1^T K-slab
                pl.BlockSpec((1, d_h1_p), lambda i, k: (0, 0), **resident),  # b1
                pl.BlockSpec((d_h1_p, d_h2_p), lambda i, k: (0, 0), **resident),  # W2^T
                pl.BlockSpec((1, d_h2_p), lambda i, k: (0, 0), **resident),  # b2
                pl.BlockSpec((d_h2_p, d_out_p), lambda i, k: (0, 0), **resident),  # W3^T
                pl.BlockSpec((1, d_out_p), lambda i, k: (0, 0), **resident),  # b3
            ],
            out_specs=pl.BlockSpec((block_b, d_out_p), lambda i, k: (i, 0)),
            scratch_shapes=[pltpu.VMEM((block_b, d_h1_p), jnp.float32)],     # fc1 acc
        ),
        compiler_params=pltpu.CompilerParams(
            dimension_semantics=("parallel", "arbitrary"),
            # Comfortably above what the tiles need; <= 48 MiB keeps it legal on v7x
            # (64 MiB physical VMEM per TC).
            vmem_limit_bytes=48 * 1024 * 1024,
        ),
        cost_estimate=pl.CostEstimate(
            flops=flops, transcendentals=0, bytes_accessed=bytes_accessed),
    )(xp, w1p, b1p, w2p, b2p, w3p, b3p)

    return out[:B, :d_out]


def init_linear_params(key, in_features, out_features):
    """Deterministic PyTorch-style init: U(-1/sqrt(fan_in), 1/sqrt(fan_in))."""
    kw, kb = jax.random.split(key)
    bound = 1.0 / jnp.sqrt(jnp.float32(in_features))
    w = jax.random.uniform(kw, (out_features, in_features), jnp.float32, -bound, bound)
    b = jax.random.uniform(kb, (out_features,), jnp.float32, -bound, bound)
    return w, b


def convnet_reference(x, w1, b1, w2, b2, w3, b3):
    h = jnp.maximum(x @ w1.T + b1, 0.0)
    h = jnp.maximum(h @ w2.T + b2, 0.0)
    return h @ w3.T + b3


def convnet_reference_mixed(x, w1, b1, w2, b2, w3, b3):
    """Emulates the kernel's precision: bf16 matmul inputs, f32 accumulation."""
    bf = jnp.bfloat16
    h = jnp.dot(x.astype(bf), w1.T.astype(bf), preferred_element_type=jnp.float32) + b1
    h = jnp.maximum(h, 0.0)
    h = jnp.dot(h.astype(bf), w2.T.astype(bf), preferred_element_type=jnp.float32) + b2
    h = jnp.maximum(h, 0.0)
    return jnp.dot(h.astype(bf), w3.T.astype(bf), preferred_element_type=jnp.float32) + b3


if __name__ == "__main__":
    # Small shapes consistent with the module's forward:
    #   stateDim stand-in = 16*16*3 = 768 (real module uses 96*96*3),
    #   n_latent_var = 256 hidden units, outputSize = 8 actions, batch = 8.
    batch = 8
    state_dim = 16 * 16 * 3   # 768
    n_latent_var = 256
    output_size = 8

    key = jax.random.PRNGKey(0)
    kx, k1, k2, k3 = jax.random.split(key, 4)

    x = jax.random.normal(kx, (batch, state_dim), jnp.float32)
    w1, b1 = init_linear_params(k1, state_dim, n_latent_var)      # fc1
    w2, b2 = init_linear_params(k2, n_latent_var, n_latent_var)   # fc2
    w3, b3 = init_linear_params(k3, n_latent_var, output_size)    # out

    # k_tile=512 so this small demo exercises the fc1 K-accumulation path (>1 K step).
    out = convnet_forward(x, w1.T, b1, w2.T, b2, w3.T, b3, k_tile=512)
    out = jax.block_until_ready(out)

    ref_mixed = convnet_reference_mixed(x, w1, b1, w2, b2, w3, b3)
    ref_f32 = convnet_reference(x, w1, b1, w2, b2, w3, b3)

    assert out.shape == (batch, output_size)
    assert jnp.allclose(out, ref_mixed, atol=2e-3, rtol=2e-3), \
        "Pallas kernel mismatch vs bf16/f32-accum reference"
    assert jnp.allclose(out, ref_f32, atol=5e-2, rtol=5e-2), \
        "Pallas kernel mismatch vs f32 reference"

    print("KERNEL_OK")
</pallas_src>

<mosaic_0001>
module attributes {stable_mosaic.version = 11 : i64} {
  func.func @_mlp_kernel(%arg0: i32, %arg1: i32, %arg2: memref<16x512xbf16, #tpu.memory_space<vmem>>, %arg3: memref<512x256xbf16, #tpu.memory_space<vmem>>, %arg4: memref<1x256xf32, #tpu.memory_space<vmem>>, %arg5: memref<256x256xbf16, #tpu.memory_space<vmem>>, %arg6: memref<1x256xf32, #tpu.memory_space<vmem>>, %arg7: memref<256x128xbf16, #tpu.memory_space<vmem>>, %arg8: memref<1x128xf32, #tpu.memory_space<vmem>>, %arg9: memref<16x128xf32, #tpu.memory_space<vmem>>, %arg10: memref<16x256xf32, #tpu.memory_space<vmem>>) attributes {dimension_semantics = [#tpu.dimension_semantics<parallel>, #tpu.dimension_semantics<arbitrary>], iteration_bounds = array<i64: 1, 2>, scalar_prefetch = 0 : i64, scratch_operands = 1 : i64, tpu.core_type = #tpu.core_type<tc>, window_params = [{transform_indices = @transform_0, window_bounds = array<i64: 16, 512>}, {transform_indices = @transform_1, window_bounds = array<i64: 512, 256>}, {pipeline_mode = #tpu.pipeline_mode<synchronous>, transform_indices = @transform_2, window_bounds = array<i64: 1, 256>}, {pipeline_mode = #tpu.pipeline_mode<synchronous>, transform_indices = @transform_3, window_bounds = array<i64: 256, 256>}, {pipeline_mode = #tpu.pipeline_mode<synchronous>, transform_indices = @transform_4, window_bounds = array<i64: 1, 256>}, {pipeline_mode = #tpu.pipeline_mode<synchronous>, transform_indices = @transform_5, window_bounds = array<i64: 256, 128>}, {pipeline_mode = #tpu.pipeline_mode<synchronous>, transform_indices = @transform_6, window_bounds = array<i64: 1, 128>}, {transform_indices = @transform_7, window_bounds = array<i64: 16, 128>}]} {
    %c0_i32 = arith.constant 0 : i32
    %0 = arith.cmpi eq, %arg1, %c0_i32 : i32
    %1 = arith.extui %0 : i1 to i32
    %c0_i32_0 = arith.constant 0 : i32
    %2 = arith.cmpi ne, %1, %c0_i32_0 : i32
    scf.if %2 {
      %cst_9 = arith.constant 0.000000e+00 : f32
      %12 = vector.broadcast %cst_9 : f32 to vector<16x256xf32>
      %c0_10 = arith.constant 0 : index
      %c0_11 = arith.constant 0 : index
      %13 = vector.load %arg10[%c0_10, %c0_11] : memref<16x256xf32, #tpu.memory_space<vmem>>, vector<16x256xf32>
      tpu.vector_store %arg10[%c0_10, %c0_11], %12 {strides = array<i32>} : memref<16x256xf32, #tpu.memory_space<vmem>>, vector<16x256xf32>,
    } else {
    }
    %c0 = arith.constant 0 : index
    %c0_1 = arith.constant 0 : index
    %3 = vector.load %arg10[%c0, %c0_1] : memref<16x256xf32, #tpu.memory_space<vmem>>, vector<16x256xf32>
    %c0_2 = arith.constant 0 : index
    %c0_3 = arith.constant 0 : index
    %4 = vector.load %arg2[%c0_2, %c0_3] : memref<16x512xbf16, #tpu.memory_space<vmem>>, vector<16x512xbf16>
    %c0_4 = arith.constant 0 : index
    %c0_5 = arith.constant 0 : index
    %5 = vector.load %arg3[%c0_4, %c0_5] : memref<512x256xbf16, #tpu.memory_space<vmem>>, vector<512x256xbf16>
    %cst = arith.constant dense<0.000000e+00> : vector<16x256xf32>
    %6 = tpu.matmul %4, %5, %cst {dimension_numbers = #tpu.dot_dimension_numbers<[1], [0], [0], [1], [0, 0, 1, 1], [], []>} : vector<16x512xbf16>, vector<512x256xbf16>, vector<16x256xf32> -> vector<16x256xf32>
    %7 = arith.addf %3, %6 : vector<16x256xf32>
    %c0_6 = arith.constant 0 : index
    %c0_7 = arith.constant 0 : index
    %8 = vector.load %arg10[%c0_6, %c0_7] : memref<16x256xf32, #tpu.memory_space<vmem>>, vector<16x256xf32>
    tpu.vector_store %arg10[%c0_6, %c0_7], %7 {strides = array<i32>} : memref<16x256xf32, #tpu.memory_space<vmem>>, vector<16x256xf32>,
    %c1_i32 = arith.constant 1 : i32
    %9 = arith.cmpi eq, %arg1, %c1_i32 : i32
    %10 = arith.extui %9 : i1 to i32
    %c0_i32_8 = arith.constant 0 : i32
    %11 = arith.cmpi ne, %10, %c0_i32_8 : i32
    scf.if %11 {
      %c0_9 = arith.constant 0 : index
      %c0_10 = arith.constant 0 : index
      %12 = vector.load %arg10[%c0_9, %c0_10] : memref<16x256xf32, #tpu.memory_space<vmem>>, vector<16x256xf32>
      %c0_11 = arith.constant 0 : index
      %c0_12 = arith.constant 0 : index
      %13 = vector.load %arg4[%c0_11, %c0_12] : memref<1x256xf32, #tpu.memory_space<vmem>>, vector<1x256xf32>
      %14 = vector.broadcast %13 : vector<1x256xf32> to vector<16x256xf32>
      %15 = arith.addf %12, %14 : vector<16x256xf32>
      %cst_13 = arith.constant 0.000000e+00 : f32
      %16 = vector.broadcast %cst_13 : f32 to vector<16x256xf32>
      %17 = arith.maximumf %15, %16 : vector<16x256xf32>
      %18 = arith.truncf %17 : vector<16x256xf32> to vector<16x256xbf16>
      %c0_14 = arith.constant 0 : index
      %c0_15 = arith.constant 0 : index
      %19 = vector.load %arg5[%c0_14, %c0_15] : memref<256x256xbf16, #tpu.memory_space<vmem>>, vector<256x256xbf16>
      %cst_16 = arith.constant dense<0.000000e+00> : vector<16x256xf32>
      %20 = tpu.matmul %18, %19, %cst_16 {dimension_numbers = #tpu.dot_dimension_numbers<[1], [0], [0], [1], [0, 0, 1, 1], [], []>} : vector<16x256xbf16>, vector<256x256xbf16>, vector<16x256xf32> -> vector<16x256xf32>
      %c0_17 = arith.constant 0 : index
      %c0_18 = arith.constant 0 : index
      %21 = vector.load %arg6[%c0_17, %c0_18] : memref<1x256xf32, #tpu.memory_space<vmem>>, vector<1x256xf32>
      %22 = vector.broadcast %21 : vector<1x256xf32> to vector<16x256xf32>
      %23 = arith.addf %20, %22 : vector<16x256xf32>
      %cst_19 = arith.constant 0.000000e+00 : f32
      %24 = vector.broadcast %cst_19 : f32 to vector<16x256xf32>
      %25 = arith.maximumf %23, %24 : vector<16x256xf32>
      %26 = arith.truncf %25 : vector<16x256xf32> to vector<16x256xbf16>
      %c0_20 = arith.constant 0 : index
      %c0_21 = arith.constant 0 : index
      %27 = vector.load %arg7[%c0_20, %c0_21] : memref<256x128xbf16, #tpu.memory_space<vmem>>, vector<256x128xbf16>
      %cst_22 = arith.constant dense<0.000000e+00> : vector<16x128xf32>
      %28 = tpu.matmul %26, %27, %cst_22 {dimension_numbers = #tpu.dot_dimension_numbers<[1], [0], [0], [1], [0, 0, 1, 1], [], []>} : vector<16x256xbf16>, vector<256x128xbf16>, vector<16x128xf32> -> vector<16x128xf32>
      %c0_23 = arith.constant 0 : index
      %c0_24 = arith.constant 0 : index
      %29 = vector.load %arg8[%c0_23, %c0_24] : memref<1x128xf32, #tpu.memory_space<vmem>>, vector<1x128xf32>
      %30 = vector.broadcast %29 : vector<1x128xf32> to vector<16x128xf32>
      %31 = arith.addf %28, %30 : vector<16x128xf32>
      %c0_25 = arith.constant 0 : index
      %c0_26 = arith.constant 0 : index
      %32 = vector.load %arg9[%c0_25, %c0_26] : memref<16x128xf32, #tpu.memory_space<vmem>>, vector<16x128xf32>
      tpu.vector_store %arg9[%c0_25, %c0_26], %31 {strides = array<i32>} : memref<16x128xf32, #tpu.memory_space<vmem>>, vector<16x128xf32>,
    } else {
    }
    return
  }
  func.func @transform_0(%arg0: i32, %arg1: i32) -> (i32, i32) {
    %c0_i32 = arith.constant 0 : i32
    return %arg0, %arg1 : i32, i32
  }
  func.func @transform_1(%arg0: i32, %arg1: i32) -> (i32, i32) {
    %c0_i32 = arith.constant 0 : i32
    %c0_i32_0 = arith.constant 0 : i32
    return %arg1, %c0_i32 : i32, i32
  }
  func.func @transform_2(%arg0: i32, %arg1: i32) -> (i32, i32) {
    %c0_i32 = arith.constant 0 : i32
    %c0_i32_0 = arith.constant 0 : i32
    %c0_i32_1 = arith.constant 0 : i32
    return %c0_i32, %c0_i32_0 : i32, i32
  }
  func.func @transform_3(%arg0: i32, %arg1: i32) -> (i32, i32) {
    %c0_i32 = arith.constant 0 : i32
    %c0_i32_0 = arith.constant 0 : i32
    %c0_i32_1 = arith.constant 0 : i32
    return %c0_i32, %c0_i32_0 : i32, i32
  }
  func.func @transform_4(%arg0: i32, %arg1: i32) -> (i32, i32) {
    %c0_i32 = arith.constant 0 : i32
    %c0_i32_0 = arith.constant 0 : i32
    %c0_i32_1 = arith.constant 0 : i32
    return %c0_i32, %c0_i32_0 : i32, i32
  }
  func.func @transform_5(%arg0: i32, %arg1: i32) -> (i32, i32) {
    %c0_i32 = arith.constant 0 : i32
    %c0_i32_0 = arith.constant 0 : i32
    %c0_i32_1 = arith.constant 0 : i32
    return %c0_i32, %c0_i32_0 : i32, i32
  }
  func.func @transform_6(%arg0: i32, %arg1: i32) -> (i32, i32) {
    %c0_i32 = arith.constant 0 : i32
    %c0_i32_0 = arith.constant 0 : i32
    %c0_i32_1 = arith.constant 0 : i32
    return %c0_i32, %c0_i32_0 : i32, i32
  }
  func.func @transform_7(%arg0: i32, %arg1: i32) -> (i32, i32) {
    %c0_i32 = arith.constant 0 : i32
    %c0_i32_0 = arith.constant 0 : i32
    return %arg0, %c0_i32 : i32, i32
  }
}

</mosaic_0001>

<llo_original>
// kernel: convnet_forward.1
$region0: #{convnet_forward.1}
  #allocation0 [shape = 'u32[]', space=smem, size = 0x4, offset = 0x4, fixed_abs, tag = 'smem constant byte address 0x4 - core index']
  #allocation1 [shape = 'u32[144,128]{1,0:T(1,128)}', space=vmem, size = 0x12000, scoped, tag = 'internal scratch']
  #allocation2 [shape = 'f32[16,256]{1,0:T(8,128)}', space=vmem, size = 0x4000, scoped, tag = 'scratch operand']
  %s0 = inlined_call_operand.vmem [shape: bf16[16,1024], index: 0, kind: input, shape index: {}]
  %s1 = inlined_call_operand.vmem [shape: bf16[1024,256], index: 1, kind: input, shape index: {}]
  %s2 = inlined_call_operand.vmem [shape: f32[1,256], index: 2, kind: input, shape index: {}]
  %s3 = inlined_call_operand.vmem [shape: bf16[256,256], index: 3, kind: input, shape index: {}]
  %s4 = inlined_call_operand.vmem [shape: f32[1,256], index: 4, kind: input, shape index: {}]
  %s5 = inlined_call_operand.vmem [shape: bf16[256,128], index: 5, kind: input, shape index: {}]
  %s6 = inlined_call_operand.vmem [shape: f32[1,128], index: 6, kind: input, shape index: {}]
  %s7 = inlined_call_operand.vmem [shape: f32[16,128], index: 7, kind: output, shape index: {}]
  %s8 = sld [smem:[#allocation0]]
  $region92: #{convnet_forward.1} parent=0
    _
  %s10 = ssub.s32 1, %s8
  %s11 = scalar_select 0, %s10, %s8
  $region1: #{convnet_forward.1} parent=0
    #allocation3 [shape = 'u8[32768]{0}', space=vmem, size = 0x8000, scoped, tag = 'input window, operand 0']
    loop: start=0, step=1, limit=4
    $region2: #{convnet_forward.1} parent=1 // loop_pre_header
      _
    $region3: #{convnet_forward.1} parent=1 // loop_header
      %s13 = sphi 0, %s17
      %p14 = scmp.ge.s32.totalorder %s13, 4
      %s20 = sphi 0, %s32
      %s21 = sphi 0, %s28
      %s22 = sphi 0, %s20
      %s23 = sphi 0, %s21
      %s24 = sphi 0, %s22
      %s25 = sphi 0, %s23
      %s37 = sphi 0, %s39
      %s40 = sphi 0, %s37
      %s41 = sphi 0, %s40
      %s57 = sphi 0, %s41
      %s63 = sphi 0, %s65
      %s66 = sphi 0, %s63
      %s67 = sphi 0, %s66
      %s83 = sphi 0, %s67
      %s87 = sphi 0, %s87
      %s89 = sphi 0, %s87
      %s90 = sphi 0, %s89
      %s104 = sphi 0, %s90
      %s108 = sphi 0, %s108
      %s110 = sphi 0, %s108
      %s111 = sphi 0, %s110
      %s125 = sphi 0, %s111
      %s129 = sphi 0, %s129
      %s131 = sphi 0, %s129
      %s132 = sphi 0, %s131
      %s146 = sphi 0, %s132
      %s150 = sphi 0, %s150
      %s152 = sphi 0, %s150
      %s153 = sphi 0, %s152
      %s167 = sphi 0, %s153
      %s171 = sphi 0, %s171
      %s173 = sphi 0, %s171
      %s174 = sphi 0, %s173
      %s188 = sphi 0, %s174
      %s194 = sphi 0, %s196
      %s197 = sphi 0, %s194
      %s198 = sphi 0, %s197
      %s214 = sphi 0, %s198
    $region4: #{convnet_forward.1} parent=1 // loop_header_branch
      %16 = sbr.rel (%p14) target = $region8
    $region5: #{convnet_forward.1} parent=1 // loop_body
      %s18 = ssub.s32 %s13, 1
      %s19 = ssub.s32 %s13, 2
      %s26 = sadd.s32 1, %s21
      %p27 = scmp.ge.s32.totalorder %s26, 2
      %s28 = scalar_select %p27, 0, %s26
      %s29 = sadd.s32 1, %s20
      %s30 = scalar_select %p27, %s29, %s20
      %p31 = scmp.ge.s32.totalorder %s30, 1
      %s32 = scalar_select %p31, 0, %s30
      %s33 = ssub.s32 %s20, %s32
      %s34 = ssub.s32 %s21, %s28
      %s35 = sor.u32 %s33, %s34
      %p36 = scmp.eq.s32.totalorder %s35, 0
      %s38 = sadd.s32 %s37, 1
      %s39 = scalar_select %p36, %s37, %s38
      %p42 = pneg %p36
      %p43 = scmp.eq.s32.totalorder %s13, 1
      %p44 = por %p42, %p43
      %p45 = scmp.ne.s32.totalorder %s37, %s40
      %p46 = scmp.eq.s32.totalorder %s13, 0
      %p47 = por %p45, %p46
      %p48 = scmp.ne.s32.totalorder %s37, %s40
      %p49 = scmp.eq.s32.totalorder %s18, 1
      %p50 = por %p48, %p49
      %p51 = scmp.ne.s32.totalorder %s40, %s41
      %p52 = scmp.eq.s32.totalorder %s18, 0
      %p53 = por %p51, %p52
      %p54 = scmp.ne.s32.totalorder %s40, %s41
      %p55 = scmp.eq.s32.totalorder %s19, 1
      %p56 = por %p54, %p55
      %p58 = scmp.ne.s32.totalorder %s41, %s57
      %p59 = scmp.eq.s32.totalorder %s19, 0
      %p60 = por %p58, %p59
      %s61 = ssub.s32 %s21, %s28
      %p62 = scmp.eq.s32.totalorder %s61, 0
      %s64 = sadd.s32 %s63, 1
      %s65 = scalar_select %p62, %s63, %s64
      %p68 = pneg %p62
      %p69 = scmp.eq.s32.totalorder %s13, 1
      %p70 = por %p68, %p69
      %p71 = scmp.ne.s32.totalorder %s63, %s66
      %p72 = scmp.eq.s32.totalorder %s13, 0
      %p73 = por %p71, %p72
      %p74 = scmp.ne.s32.totalorder %s63, %s66
      %p75 = scmp.eq.s32.totalorder %s18, 1
      %p76 = por %p74, %p75
      %p77 = scmp.ne.s32.totalorder %s66, %s67
      %p78 = scmp.eq.s32.totalorder %s18, 0
      %p79 = por %p77, %p78
      %p80 = scmp.ne.s32.totalorder %s66, %s67
      %p81 = scmp.eq.s32.totalorder %s19, 1
      %p82 = por %p80, %p81
      %p84 = scmp.ne.s32.totalorder %s67, %s83
      %p85 = scmp.eq.s32.totalorder %s19, 0
      %p86 = por %p84, %p85
      %s88 = sadd.s32 %s87, 1
      %p91 = scmp.eq.s32.totalorder %s13, 1
      %p92 = scmp.ne.s32.totalorder %s87, %s89
      %p93 = scmp.eq.s32.totalorder %s13, 0
      %p94 = por %p92, %p93
      %p95 = scmp.ne.s32.totalorder %s87, %s89
      %p96 = scmp.eq.s32.totalorder %s18, 1
      %p97 = por %p95, %p96
      %p98 = scmp.ne.s32.totalorder %s89, %s90
      %p99 = scmp.eq.s32.totalorder %s18, 0
      %p100 = por %p98, %p99
      %p101 = scmp.ne.s32.totalorder %s89, %s90
      %p102 = scmp.eq.s32.totalorder %s19, 1
      %p103 = por %p101, %p102
      %p105 = scmp.ne.s32.totalorder %s90, %s104
      %p106 = scmp.eq.s32.totalorder %s19, 0
      %p107 = por %p105, %p106
      %s109 = sadd.s32 %s108, 1
      %p112 = scmp.eq.s32.totalorder %s13, 1
      %p113 = scmp.ne.s32.totalorder %s108, %s110
      %p114 = scmp.eq.s32.totalorder %s13, 0
      %p115 = por %p113, %p114
      %p116 = scmp.ne.s32.totalorder %s108, %s110
      %p117 = scmp.eq.s32.totalorder %s18, 1
      %p118 = por %p116, %p117
      %p119 = scmp.ne.s32.totalorder %s110, %s111
      %p120 = scmp.eq.s32.totalorder %s18, 0
      %p121 = por %p119, %p120
      %p122 = scmp.ne.s32.totalorder %s110, %s111
      %p123 = scmp.eq.s32.totalorder %s19, 1
      %p124 = por %p122, %p123
      %p126 = scmp.ne.s32.totalorder %s111, %s125
      %p127 = scmp.eq.s32.totalorder %s19, 0
      %p128 = por %p126, %p127
      %s130 = sadd.s32 %s129, 1
      %p133 = scmp.eq.s32.totalorder %s13, 1
      %p134 = scmp.ne.s32.totalorder %s129, %s131
      %p135 = scmp.eq.s32.totalorder %s13, 0
      %p136 = por %p134, %p135
      %p137 = scmp.ne.s32.totalorder %s129, %s131
      %p138 = scmp.eq.s32.totalorder %s18, 1
      %p139 = por %p137, %p138
      %p140 = scmp.ne.s32.totalorder %s131, %s132
      %p141 = scmp.eq.s32.totalorder %s18, 0
      %p142 = por %p140, %p141
      %p143 = scmp.ne.s32.totalorder %s131, %s132
      %p144 = scmp.eq.s32.totalorder %s19, 1
      %p145 = por %p143, %p144
      %p147 = scmp.ne.s32.totalorder %s132, %s146
      %p148 = scmp.eq.s32.totalorder %s19, 0
      %p149 = por %p147, %p148
      %s151 = sadd.s32 %s150, 1
      %p154 = scmp.eq.s32.totalorder %s13, 1
      %p155 = scmp.ne.s32.totalorder %s150, %s152
      %p156 = scmp.eq.s32.totalorder %s13, 0
      %p157 = por %p155, %p156
      %p158 = scmp.ne.s32.totalorder %s150, %s152
      %p159 = scmp.eq.s32.totalorder %s18, 1
      %p160 = por %p158, %p159
      %p161 = scmp.ne.s32.totalorder %s152, %s153
      %p162 = scmp.eq.s32.totalorder %s18, 0
      %p163 = por %p161, %p162
      %p164 = scmp.ne.s32.totalorder %s152, %s153
      %p165 = scmp.eq.s32.totalorder %s19, 1
      %p166 = por %p164, %p165
      %p168 = scmp.ne.s32.totalorder %s153, %s167
      %p169 = scmp.eq.s32.totalorder %s19, 0
      %p170 = por %p168, %p169
      %s172 = sadd.s32 %s171, 1
      %p175 = scmp.eq.s32.totalorder %s13, 1
      %p176 = scmp.ne.s32.totalorder %s171, %s173
      %p177 = scmp.eq.s32.totalorder %s13, 0
      %p178 = por %p176, %p177
      %p179 = scmp.ne.s32.totalorder %s171, %s173
      %p180 = scmp.eq.s32.totalorder %s18, 1
      %p181 = por %p179, %p180
      %p182 = scmp.ne.s32.totalorder %s173, %s174
      %p183 = scmp.eq.s32.totalorder %s18, 0
      %p184 = por %p182, %p183
      %p185 = scmp.ne.s32.totalorder %s173, %s174
      %p186 = scmp.eq.s32.totalorder %s19, 1
      %p187 = por %p185, %p186
      %p189 = scmp.ne.s32.totalorder %s174, %s188
      %p190 = scmp.eq.s32.totalorder %s19, 0
      %p191 = por %p189, %p190
      %s192 = ssub.s32 %s20, %s32
      %p193 = scmp.eq.s32.totalorder %s192, 0
      %s195 = sadd.s32 %s194, 1
      %s196 = scalar_select %p193, %s194, %s195
      %p199 = pneg %p193
      %p200 = scmp.eq.s32.totalorder %s13, 1
      %p201 = por %p199, %p200
      %p202 = scmp.ne.s32.totalorder %s194, %s197
      %p203 = scmp.eq.s32.totalorder %s13, 0
      %p204 = por %p202, %p203
      %p205 = scmp.ne.s32.totalorder %s194, %s197
      %p206 = scmp.eq.s32.totalorder %s18, 1
      %p207 = por %p205, %p206
      %p208 = scmp.ne.s32.totalorder %s197, %s198
      %p209 = scmp.eq.s32.totalorder %s18, 0
      %p210 = por %p208, %p209
      %p211 = scmp.ne.s32.totalorder %s197, %s198
      %p212 = scmp.eq.s32.totalorder %s19, 1
      %p213 = por %p211, %p212
      %p215 = scmp.ne.s32.totalorder %s198, %s214
      %p216 = scmp.eq.s32.totalorder %s19, 0
      %p217 = por %p215, %p216
      %p218 = scmp.le.s32.totalorder 1, %s13
      %p219 = scmp.lt.s32.totalorder %s13, 3
      %p220 = pnand %p218, %p219
      %p221 = pneg %p220
      // Predicated region
      $region9: #{convnet_forward.1} parent=5 // pred_check
        _
      $region10: #{convnet_forward.1} parent=5 // pred_check_branch
        %223 = sbr.rel (%p220) target = $region12
      $region11: #{convnet_forward.1} parent=5 // pred_region
        %s224 = ssub.s32 %s13, 1
        // Predicated region
        $region13: #{convnet_forward.1} parent=11 // pred_check
          %p225 = pneg %p100
        $region14: #{convnet_forward.1} parent=11 // pred_check_branch
          %227 = sbr.rel (%p225) target = $region16
        $region15: #{convnet_forward.1} parent=11 // pred_region
          _
        $region16: #{convnet_forward.1} parent=11 // pred_fallthru
          _
        // Predicated region
        $region17: #{convnet_forward.1} parent=11 // pred_check
          %p228 = pneg %p121
        $region18: #{convnet_forward.1} parent=11 // pred_check_branch
          %230 = sbr.rel (%p228) target = $region20
        $region19: #{convnet_forward.1} parent=11 // pred_region
          _
        $region20: #{convnet_forward.1} parent=11 // pred_fallthru
          _
        // Predicated region
        $region21: #{convnet_forward.1} parent=11 // pred_check
          %p231 = pneg %p142
        $region22: #{convnet_forward.1} parent=11 // pred_check_branch
          %233 = sbr.rel (%p231) target = $region24
        $region23: #{convnet_forward.1} parent=11 // pred_region
          _
        $region24: #{convnet_forward.1} parent=11 // pred_fallthru
          _
        // Predicated region
        $region25: #{convnet_forward.1} parent=11 // pred_check
          %p234 = pneg %p163
        $region26: #{convnet_forward.1} parent=11 // pred_check_branch
          %236 = sbr.rel (%p234) target = $region28
        $region27: #{convnet_forward.1} parent=11 // pred_region
          _
        $region28: #{convnet_forward.1} parent=11 // pred_fallthru
          _
        // Predicated region
        $region29: #{convnet_forward.1} parent=11 // pred_check
          %p237 = pneg %p184
        $region30: #{convnet_forward.1} parent=11 // pred_check_branch
          %239 = sbr.rel (%p237) target = $region32
        $region31: #{convnet_forward.1} parent=11 // pred_region
          _
        $region32: #{convnet_forward.1} parent=11 // pred_fallthru
          _
      $region12: #{convnet_forward.1} parent=5 // pred_fallthru
        _
      %p240 = scmp.lt.s32.totalorder %s13, 2
      // Predicated region
      $region33: #{convnet_forward.1} parent=5 // pred_check
        %p241 = pneg %p240
      $region34: #{convnet_forward.1} parent=5 // pred_check_branch
        %243 = sbr.rel (%p241) target = $region36
      $region35: #{convnet_forward.1} parent=5 // pred_region
        // Predicated region
        $region37: #{convnet_forward.1} parent=35 // pred_check
          %p244 = pneg %p47
        $region38: #{convnet_forward.1} parent=35 // pred_check_branch
          %246 = sbr.rel (%p244) target = $region40
        $region39: #{convnet_forward.1} parent=35 // pred_region
          %s247 = sand.u32 %s37, 1
          %s248 = sand.u32 %s37, 1
          %s249 = smul.addr %s248, 32
          %s250 = scalar_lea.vmem [#allocation3], %s249
          %s251 = smul.u32 2, %s20
          %s252 = smul.u32 4, %s21
          %s253 = smul.addr %s251, 8
          %s254 = sadd.s32 %s252, %s253
          %s255 = smul.addr %s254, 4
          %s256 = scalar_lea.vmem %s0, %s255
          // Predicated region
          $region41: #{convnet_forward.1} parent=39 // pred_check
            _
          $region42: #{convnet_forward.1} parent=39 // pred_check_branch
            %258 = sbr.rel (0) target = $region44
          $region43: #{convnet_forward.1} parent=39 // pred_region
            // Predicated region
            $region45: #{convnet_forward.1} parent=43 // pred_check
              _
            $region46: #{convnet_forward.1} parent=43 // pred_check_branch
              %260 = sbr.rel (0) target = $region48
            $region47: #{convnet_forward.1} parent=43 // pred_region
              loop: start=0, step=1, limit=1
              $region49: #{convnet_forward.1} parent=47 // loop_pre_header
                _
              $region50: #{convnet_forward.1} parent=47 // loop_header
                %s262 = sphi 0, %s266
                %p263 = scmp.ge.s32.totalorder %s262, 1
                %s267 = sphi %s256, %s256
                %s268 = sphi %s250, %s250
              $region51: #{convnet_forward.1} parent=47 // loop_header_branch
                %265 = sbr.rel (%p263) target = $region55
              $region52: #{convnet_forward.1} parent=47 // loop_body
                %v269 = vld [vmem:[%s267] sm:$0xff]
                %270 = vst [vmem:[%s268] sm:$0xff] %v269
                %v271 = vld [vmem:[%s267 + $0x8] sm:$0xff]
                %272 = vst [vmem:[%s268 + $0x8] sm:$0xff] %v271
                %v273 = vld [vmem:[%s267 + $0x20] sm:$0xff]
                %274 = vst [vmem:[%s268 + $0x10] sm:$0xff] %v273
                %v275 = vld [vmem:[%s267 + $0x28] sm:$0xff]
                %276 = vst [vmem:[%s268 + $0x18] sm:$0xff] %v275
              $region53: #{convnet_forward.1} parent=47 // loop_footer
                %s266 = sadd.s32 1, %s262
              $region54: #{convnet_forward.1} parent=47 // loop_footer_branch
                %261 = sbr.rel target = $region50
              $region55: #{convnet_forward.1} parent=47 // loop_exit
                _
            $region48: #{convnet_forward.1} parent=43 // pred_fallthru
              _
            // Predicated region
            $region56: #{convnet_forward.1} parent=43 // pred_check
              _
            $region57: #{convnet_forward.1} parent=43 // pred_check_branch
              %278 = sbr.rel target = $region59
            $region58: #{convnet_forward.1} parent=43 // pred_region
              _
            $region59: #{convnet_forward.1} parent=43 // pred_fallthru
              _
          $region44: #{convnet_forward.1} parent=39 // pred_fallthru
            _
          %279 = vnop
        $region40: #{convnet_forward.1} parent=35 // pred_fallthru
          _
        // Predicated region
        $region60: #{convnet_forward.1} parent=35 // pred_check
          %p280 = pneg %p73
        $region61: #{convnet_forward.1} parent=35 // pred_check_branch
          %282 = sbr.rel (%p280) target = $region63
        $region62: #{convnet_forward.1} parent=35 // pred_region
          %s283 = smul.u32 64, %s21
          %p284 = scmp.lt.s32.totalorder %s283, 127
          %s285 = scalar_select %p284, %s283, 127
          %s286 = smul.addr %s285, 2
          %s287 = smul.addr %s286, 4
          %s288 = scalar_lea.vmem %s1, %s287
          %s289 = smul.u32 64, %s21
        $region63: #{convnet_forward.1} parent=35 // pred_fallthru
          _
      $region36: #{convnet_forward.1} parent=5 // pred_fallthru
        _
      %p290 = scmp.le.s32.totalorder 1, %s13
      %p291 = scmp.lt.s32.totalorder %s13, 3
      %p292 = pnand %p290, %p291
      %p293 = pneg %p292
      // Predicated region
      $region64: #{convnet_forward.1} parent=5 // pred_check
        _
      $region65: #{convnet_forward.1} parent=5 // pred_check_branch
        %295 = sbr.rel (%p292) target = $region67
      $region66: #{convnet_forward.1} parent=5 // pred_region
        %s296 = ssub.s32 %s13, 1
        %s297 = sand.u32 %s40, 1
        %s298 = sand.u32 %s40, 1
        %s299 = smul.addr %s298, 32
        %s300 = scalar_lea.vmem [#allocation3], %s299
        // Predicated region
        $region68: #{convnet_forward.1} parent=66 // pred_check
          %p301 = pneg %p53
        $region69: #{convnet_forward.1} parent=66 // pred_check_branch
          %303 = sbr.rel (%p301) target = $region71
        $region70: #{convnet_forward.1} parent=66 // pred_region
          _
        $region71: #{convnet_forward.1} parent=66 // pred_fallthru
          _
        %s304 = sand.u32 %s40, 1
        %s305 = sand.u32 %s40, 1
        %s306 = smul.addr %s305, 32
        %s307 = scalar_lea.vmem [#allocation3], %s306
        %p308 = pneg %p53
        %p309 = pneg %p50
        %s310 = smul.u32 64, %s23
        %p311 = scmp.lt.s32.totalorder %s310, 127
        %s312 = scalar_select %p311, %s310, 127
        %s313 = smul.addr %s312, 2
        %s314 = smul.addr %s313, 4
        %s315 = scalar_lea.vmem %s1, %s314
        %p316 = pneg %p79
        %p317 = pneg %p76
        %p318 = pneg %p100
        %p319 = pneg %p97
        %p320 = pneg %p121
        %p321 = pneg %p118
        %p322 = pneg %p142
        %p323 = pneg %p139
        %p324 = pneg %p163
        %p325 = pneg %p160
        %p326 = pneg %p184
        %p327 = pneg %p181
        %p328 = pneg %p210
        %p329 = pneg %p207
        %s330 = smul.u32 2, %s22
        %p331 = scmp.lt.s32.totalorder %s330, 1
        %s332 = scalar_select %p331, %s330, 1
        %s333 = smul.addr %s332, 8
        %s334 = scalar_lea.vmem %s7, %s333
        %s335 = smul.u32 2, %s22
        %s336 = smul.u32 4, %s23
        %s337 = smul.u32 64, %s23
        %p338 = scmp.lt.s32.totalorder %s337, 127
        %s339 = scalar_select %p338, %s337, 127
        %s340 = smul.addr %s339, 2
        %s341 = smul.addr %s340, 4
        %s342 = scalar_lea.vmem %s1, %s341
        %s343 = smul.u32 64, %s23
        %s344 = smul.u32 2, %s22
        %p345 = scmp.lt.s32.totalorder %s344, 1
        %s346 = scalar_select %p345, %s344, 1
        %s347 = smul.addr %s346, 8
        %s348 = scalar_lea.vmem %s7, %s347
        %s349 = smul.u32 2, %s22
        %p351 = scmp.eq.s32.totalorder %s23, 0
        // Predicated region
        $region72: #{convnet_forward.1} parent=66 // pred_check
          %p352 = pneg %p351
        $region73: #{convnet_forward.1} parent=66 // pred_check_branch
          %354 = sbr.rel (%p352) target = $region75
        $region74: #{convnet_forward.1} parent=66 // pred_region
          %355 = vst [vmem:[#allocation2] sm:$0xff] 0.0
          %356 = vst [vmem:[#allocation2 + $0x8] sm:$0xff] 0.0
          %357 = vst [vmem:[#allocation2 + $0x10] sm:$0xff] 0.0
          %358 = vst [vmem:[#allocation2 + $0x18] sm:$0xff] 0.0
        $region75: #{convnet_forward.1} parent=66 // pred_fallthru
          _
        %v359 = vld [vmem:[#allocation2] sm:$0xff]
        %v360 = vld [vmem:[#allocation2 + $0x8] sm:$0xff]
        %v361 = vld [vmem:[#allocation2 + $0x10] sm:$0xff]
        %v362 = vld [vmem:[#allocation2 + $0x18] sm:$0xff]
        %v363 = vld [vmem:[%s300] sm:$0xff]
        %v364 = vld [vmem:[%s300 + $0x8] sm:$0xff]
        %v365 = vld [vmem:[%s300 + $0x10] sm:$0xff]
        %v366 = vld [vmem:[%s300 + $0x18] sm:$0xff]
        %v367 = vld [vmem:[%s342] sm:$0xff]
        %v368 = vld [vmem:[%s342 + $0x8] sm:$0xff]
        %v369 = vld [vmem:[%s342 + $0x10] sm:$0xff]
        %v370 = vld [vmem:[%s342 + $0x18] sm:$0xff]
        %v371 = vld [vmem:[%s342 + $0x20] sm:$0xff]
        %v372 = vld [vmem:[%s342 + $0x28] sm:$0xff]
        %v373 = vld [vmem:[%s342 + $0x30] sm:$0xff]
        %v374 = vld [vmem:[%s342 + $0x38] sm:$0xff]
        %v375 = vld [vmem:[%s342 + $0x40] sm:$0xff]
        %v376 = vld [vmem:[%s342 + $0x48] sm:$0xff]
        %v377 = vld [vmem:[%s342 + $0x50] sm:$0xff]
        %v378 = vld [vmem:[%s342 + $0x58] sm:$0xff]
        %v379 = vld [vmem:[%s342 + $0x60] sm:$0xff]
        %v380 = vld [vmem:[%s342 + $0x68] sm:$0xff]
        %v381 = vld [vmem:[%s342 + $0x70] sm:$0xff]
        %v382 = vld [vmem:[%s342 + $0x78] sm:$0xff]
        %v383 = vld [vmem:[%s342 + $0x80] sm:$0xff]
        %v384 = vld [vmem:[%s342 + $0x88] sm:$0xff]
        %v385 = vld [vmem:[%s342 + $0x90] sm:$0xff]
        %v386 = vld [vmem:[%s342 + $0x98] sm:$0xff]
        %v387 = vld [vmem:[%s342 + $0xa0] sm:$0xff]
        %v388 = vld [vmem:[%s342 + $0xa8] sm:$0xff]
        %v389 = vld [vmem:[%s342 + $0xb0] sm:$0xff]
        %v390 = vld [vmem:[%s342 + $0xb8] sm:$0xff]
        %v391 = vld [vmem:[%s342 + $0xc0] sm:$0xff]
        %v392 = vld [vmem:[%s342 + $0xc8] sm:$0xff]
        %v393 = vld [vmem:[%s342 + $0xd0] sm:$0xff]
        %v394 = vld [vmem:[%s342 + $0xd8] sm:$0xff]
        %v395 = vld [vmem:[%s342 + $0xe0] sm:$0xff]
        %v396 = vld [vmem:[%s342 + $0xe8] sm:$0xff]
        %v397 = vld [vmem:[%s342 + $0xf0] sm:$0xff]
        %v398 = vld [vmem:[%s342 + $0xf8] sm:$0xff]
        %v399 = vld [vmem:[%s342 + $0x100] sm:$0xff]
        %v400 = vld [vmem:[%s342 + $0x108] sm:$0xff]
        %v401 = vld [vmem:[%s342 + $0x110] sm:$0xff]
        %v402 = vld [vmem:[%s342 + $0x118] sm:$0xff]
        %v403 = vld [vmem:[%s342 + $0x120] sm:$0xff]
        %v404 = vld [vmem:[%s342 + $0x128] sm:$0xff]
        %v405 = vld [vmem:[%s342 + $0x130] sm:$0xff]
        %v406 = vld [vmem:[%s342 + $0x138] sm:$0xff]
        %v407 = vld [vmem:[%s342 + $0x140] sm:$0xff]
        %v408 = vld [vmem:[%s342 + $0x148] sm:$0xff]
        %v409 = vld [vmem:[%s342 + $0x150] sm:$0xff]
        %v410 = vld [vmem:[%s342 + $0x158] sm:$0xff]
        %v411 = vld [vmem:[%s342 + $0x160] sm:$0xff]
        %v412 = vld [vmem:[%s342 + $0x168] sm:$0xff]
        %v413 = vld [vmem:[%s342 + $0x170] sm:$0xff]
        %v414 = vld [vmem:[%s342 + $0x178] sm:$0xff]
        %v415 = vld [vmem:[%s342 + $0x180] sm:$0xff]
        %v416 = vld [vmem:[%s342 + $0x188] sm:$0xff]
        %v417 = vld [vmem:[%s342 + $0x190] sm:$0xff]
        %v418 = vld [vmem:[%s342 + $0x198] sm:$0xff]
        %v419 = vld [vmem:[%s342 + $0x1a0] sm:$0xff]
        %v420 = vld [vmem:[%s342 + $0x1a8] sm:$0xff]
        %v421 = vld [vmem:[%s342 + $0x1b0] sm:$0xff]
        %v422 = vld [vmem:[%s342 + $0x1b8] sm:$0xff]
        %v423 = vld [vmem:[%s342 + $0x1c0] sm:$0xff]
        %v424 = vld [vmem:[%s342 + $0x1c8] sm:$0xff]
        %v425 = vld [vmem:[%s342 + $0x1d0] sm:$0xff]
        %v426 = vld [vmem:[%s342 + $0x1d8] sm:$0xff]
        %v427 = vld [vmem:[%s342 + $0x1e0] sm:$0xff]
        %v428 = vld [vmem:[%s342 + $0x1e8] sm:$0xff]
        %v429 = vld [vmem:[%s342 + $0x1f0] sm:$0xff]
        %v430 = vld [vmem:[%s342 + $0x1f8] sm:$0xff]
        %v435 = vunpack.c.l.b16 %v363
        %v436 = vunpack.c.h.b16 %v363
        %v437 = vunpack.c.l.b16 %v364
        %v438 = vunpack.c.h.b16 %v364
        %v439 = vunpack.c.l.b16 %v365
        %v440 = vunpack.c.h.b16 %v365
        %v441 = vunpack.c.l.b16 %v366
        %v442 = vunpack.c.h.b16 %v366
        %v443 = vpack.c.b16 %v439, %v435
        %v444 = vpack.c.b16 %v440, %v436
        %v445 = vpack.c.b16 %v441, %v437
        %v446 = vpack.c.b16 %v442, %v438
        %v515 = vunpack.c.l.b16 %v367
        %v516 = vunpack.c.h.b16 %v367
        %v517 = vunpack.c.l.b16 %v368
        %v518 = vunpack.c.h.b16 %v368
        %v519 = vunpack.c.l.b16 %v369
        %v520 = vunpack.c.h.b16 %v369
        %v521 = vunpack.c.l.b16 %v370
        %v522 = vunpack.c.h.b16 %v370
        %v523 = vunpack.c.l.b16 %v371
        %v524 = vunpack.c.h.b16 %v371
        %v525 = vunpack.c.l.b16 %v372
        %v526 = vunpack.c.h.b16 %v372
        %v527 = vunpack.c.l.b16 %v373
        %v528 = vunpack.c.h.b16 %v373
        %v529 = vunpack.c.l.b16 %v374
        %v530 = vunpack.c.h.b16 %v374
        %v531 = vunpack.c.l.b16 %v375
        %v532 = vunpack.c.h.b16 %v375
        %v533 = vunpack.c.l.b16 %v376
        %v534 = vunpack.c.h.b16 %v376
        %v535 = vunpack.c.l.b16 %v377
        %v536 = vunpack.c.h.b16 %v377
        %v537 = vunpack.c.l.b16 %v378
        %v538 = vunpack.c.h.b16 %v378
        %v539 = vunpack.c.l.b16 %v379
        %v540 = vunpack.c.h.b16 %v379
        %v541 = vunpack.c.l.b16 %v380
        %v542 = vunpack.c.h.b16 %v380
        %v543 = vunpack.c.l.b16 %v381
        %v544 = vunpack.c.h.b16 %v381
        %v545 = vunpack.c.l.b16 %v382
        %v546 = vunpack.c.h.b16 %v382
        %v547 = vunpack.c.l.b16 %v383
        %v548 = vunpack.c.h.b16 %v383
        %v549 = vunpack.c.l.b16 %v384
        %v550 = vunpack.c.h.b16 %v384
        %v551 = vunpack.c.l.b16 %v385
        %v552 = vunpack.c.h.b16 %v385
        %v553 = vunpack.c.l.b16 %v386
        %v554 = vunpack.c.h.b16 %v386
        %v555 = vunpack.c.l.b16 %v387
        %v556 = vunpack.c.h.b16 %v387
        %v557 = vunpack.c.l.b16 %v388
        %v558 = vunpack.c.h.b16 %v388
        %v559 = vunpack.c.l.b16 %v389
        %v560 = vunpack.c.h.b16 %v389
        %v561 = vunpack.c.l.b16 %v390
        %v562 = vunpack.c.h.b16 %v390
        %v563 = vunpack.c.l.b16 %v391
        %v564 = vunpack.c.h.b16 %v391
        %v565 = vunpack.c.l.b16 %v392
        %v566 = vunpack.c.h.b16 %v392
        %v567 = vunpack.c.l.b16 %v393
        %v568 = vunpack.c.h.b16 %v393
        %v569 = vunpack.c.l.b16 %v394
        %v570 = vunpack.c.h.b16 %v394
        %v571 = vunpack.c.l.b16 %v395
        %v572 = vunpack.c.h.b16 %v395
        %v573 = vunpack.c.l.b16 %v396
        %v574 = vunpack.c.h.b16 %v396
        %v575 = vunpack.c.l.b16 %v397
        %v576 = vunpack.c.h.b16 %v397
        %v577 = vunpack.c.l.b16 %v398
        %v578 = vunpack.c.h.b16 %v398
        %v579 = vunpack.c.l.b16 %v399
        %v580 = vunpack.c.h.b16 %v399
        %v581 = vunpack.c.l.b16 %v400
        %v582 = vunpack.c.h.b16 %v400
        %v583 = vunpack.c.l.b16 %v401
        %v584 = vunpack.c.h.b16 %v401
        %v585 = vunpack.c.l.b16 %v402
        %v586 = vunpack.c.h.b16 %v402
        %v587 = vunpack.c.l.b16 %v403
        %v588 = vunpack.c.h.b16 %v403
        %v589 = vunpack.c.l.b16 %v404
        %v590 = vunpack.c.h.b16 %v404
        %v591 = vunpack.c.l.b16 %v405
        %v592 = vunpack.c.h.b16 %v405
        %v593 = vunpack.c.l.b16 %v406
        %v594 = vunpack.c.h.b16 %v406
        %v595 = vunpack.c.l.b16 %v407
        %v596 = vunpack.c.h.b16 %v407
        %v597 = vunpack.c.l.b16 %v408
        %v598 = vunpack.c.h.b16 %v408
        %v599 = vunpack.c.l.b16 %v409
        %v600 = vunpack.c.h.b16 %v409
        %v601 = vunpack.c.l.b16 %v410
        %v602 = vunpack.c.h.b16 %v410
        %v603 = vunpack.c.l.b16 %v411
        %v604 = vunpack.c.h.b16 %v411
        %v605 = vunpack.c.l.b16 %v412
        %v606 = vunpack.c.h.b16 %v412
        %v607 = vunpack.c.l.b16 %v413
        %v608 = vunpack.c.h.b16 %v413
        %v609 = vunpack.c.l.b16 %v414
        %v610 = vunpack.c.h.b16 %v414
        %v611 = vunpack.c.l.b16 %v415
        %v612 = vunpack.c.h.b16 %v415
        %v613 = vunpack.c.l.b16 %v416
        %v614 = vunpack.c.h.b16 %v416
        %v615 = vunpack.c.l.b16 %v417
        %v616 = vunpack.c.h.b16 %v417
        %v617 = vunpack.c.l.b16 %v418
        %v618 = vunpack.c.h.b16 %v418
        %v619 = vunpack.c.l.b16 %v419
        %v620 = vunpack.c.h.b16 %v419
        %v621 = vunpack.c.l.b16 %v420
        %v622 = vunpack.c.h.b16 %v420
        %v623 = vunpack.c.l.b16 %v421
        %v624 = vunpack.c.h.b16 %v421
        %v625 = vunpack.c.l.b16 %v422
        %v626 = vunpack.c.h.b16 %v422
        %v627 = vunpack.c.l.b16 %v423
        %v628 = vunpack.c.h.b16 %v423
        %v629 = vunpack.c.l.b16 %v424
        %v630 = vunpack.c.h.b16 %v424
        %v631 = vunpack.c.l.b16 %v425
        %v632 = vunpack.c.h.b16 %v425
        %v633 = vunpack.c.l.b16 %v426
        %v634 = vunpack.c.h.b16 %v426
        %v635 = vunpack.c.l.b16 %v427
        %v636 = vunpack.c.h.b16 %v427
        %v637 = vunpack.c.l.b16 %v428
        %v638 = vunpack.c.h.b16 %v428
        %v639 = vunpack.c.l.b16 %v429
        %v640 = vunpack.c.h.b16 %v429
        %v641 = vunpack.c.l.b16 %v430
        %v642 = vunpack.c.h.b16 %v430
        %v643 = vpack.c.b16 %v517, %v515
        %v644 = vpack.c.b16 %v518, %v516
        %v645 = vpack.c.b16 %v521, %v519
        %v646 = vpack.c.b16 %v522, %v520
        %v647 = vpack.c.b16 %v525, %v523
        %v648 = vpack.c.b16 %v526, %v524
        %v649 = vpack.c.b16 %v529, %v527
        %v650 = vpack.c.b16 %v530, %v528
        %v651 = vpack.c.b16 %v533, %v531
        %v652 = vpack.c.b16 %v534, %v532
        %v653 = vpack.c.b16 %v537, %v535
        %v654 = vpack.c.b16 %v538, %v536
        %v655 = vpack.c.b16 %v541, %v539
        %v656 = vpack.c.b16 %v542, %v540
        %v657 = vpack.c.b16 %v545, %v543
        %v658 = vpack.c.b16 %v546, %v544
        %v659 = vpack.c.b16 %v549, %v547
        %v660 = vpack.c.b16 %v550, %v548
        %v661 = vpack.c.b16 %v553, %v551
        %v662 = vpack.c.b16 %v554, %v552
        %v663 = vpack.c.b16 %v557, %v555
        %v664 = vpack.c.b16 %v558, %v556
        %v665 = vpack.c.b16 %v561, %v559
        %v666 = vpack.c.b16 %v562, %v560
        %v667 = vpack.c.b16 %v565, %v563
        %v668 = vpack.c.b16 %v566, %v564
        %v669 = vpack.c.b16 %v569, %v567
        %v670 = vpack.c.b16 %v570, %v568
        %v671 = vpack.c.b16 %v573, %v571
        %v672 = vpack.c.b16 %v574, %v572
        %v673 = vpack.c.b16 %v577, %v575
        %v674 = vpack.c.b16 %v578, %v576
        %v675 = vpack.c.b16 %v581, %v579
        %v676 = vpack.c.b16 %v582, %v580
        %v677 = vpack.c.b16 %v585, %v583
        %v678 = vpack.c.b16 %v586, %v584
        %v679 = vpack.c.b16 %v589, %v587
        %v680 = vpack.c.b16 %v590, %v588
        %v681 = vpack.c.b16 %v593, %v591
        %v682 = vpack.c.b16 %v594, %v592
        %v683 = vpack.c.b16 %v597, %v595
        %v684 = vpack.c.b16 %v598, %v596
        %v685 = vpack.c.b16 %v601, %v599
        %v686 = vpack.c.b16 %v602, %v600
        %v687 = vpack.c.b16 %v605, %v603
        %v688 = vpack.c.b16 %v606, %v604
        %v689 = vpack.c.b16 %v609, %v607
        %v690 = vpack.c.b16 %v610, %v608
        %v691 = vpack.c.b16 %v613, %v611
        %v692 = vpack.c.b16 %v614, %v612
        %v693 = vpack.c.b16 %v617, %v615
        %v694 = vpack.c.b16 %v618, %v616
        %v695 = vpack.c.b16 %v621, %v619
        %v696 = vpack.c.b16 %v622, %v620
        %v697 = vpack.c.b16 %v625, %v623
        %v698 = vpack.c.b16 %v626, %v624
        %v699 = vpack.c.b16 %v629, %v627
        %v700 = vpack.c.b16 %v630, %v628
        %v701 = vpack.c.b16 %v633, %v631
        %v702 = vpack.c.b16 %v634, %v632
        %v703 = vpack.c.b16 %v637, %v635
        %v704 = vpack.c.b16 %v638, %v636
        %v705 = vpack.c.b16 %v641, %v639
        %v706 = vpack.c.b16 %v642, %v640
        %771 = vmatprep.subr.bf16.mxu0 %v644
        %772 = vmatpush1.bf16.msra.mxu0 %v643
        %773 = vmatprep.subr.bf16.mxu0 %v646
        %774 = vmatpush1.bf16.msra.mxu0 %v645
        %775 = vmatprep.subr.bf16.mxu0 %v648
        %776 = vmatpush1.bf16.msra.mxu0 %v647
        %777 = vmatprep.subr.bf16.mxu0 %v650
        %778 = vmatpush1.bf16.msra.mxu0 %v649
        %779 = vmatprep.subr.bf16.mxu0 %v652
        %780 = vmatpush1.bf16.msra.mxu0 %v651
        %781 = vmatprep.subr.bf16.mxu0 %v654
        %782 = vmatpush1.bf16.msra.mxu0 %v653
        %783 = vmatprep.subr.bf16.mxu0 %v656
        %784 = vmatpush1.bf16.msra.mxu0 %v655
        %785 = vmatprep.subr.bf16.mxu0 %v658
        %786 = vmatpush1.bf16.msra.mxu0 %v657
        %787 = vmatprep.subr.bf16.mxu0 %v660
        %788 = vmatpush1.bf16.msra.mxu0 %v659
        %789 = vmatprep.subr.bf16.mxu0 %v662
        %790 = vmatpush1.bf16.msra.mxu0 %v661
        %791 = vmatprep.subr.bf16.mxu0 %v664
        %792 = vmatpush1.bf16.msra.mxu0 %v663
        %793 = vmatprep.subr.bf16.mxu0 %v666
        %794 = vmatpush1.bf16.msra.mxu0 %v665
        %795 = vmatprep.subr.bf16.mxu0 %v668
        %796 = vmatpush1.bf16.msra.mxu0 %v667
        %797 = vmatprep.subr.bf16.mxu0 %v670
        %798 = vmatpush1.bf16.msra.mxu0 %v669
        %799 = vmatprep.subr.bf16.mxu0 %v672
        %800 = vmatpush1.bf16.msra.mxu0 %v671
        %801 = vmatprep.subr.bf16.mxu0 %v674
        %802 = vmatpush1.bf16.msra.mxu0 %v673
        %803 = vmatprep.mubr.bf16.mxu0 %v444
        %804 = vmatmul.mubr.bf16.gmra.mrb[0].mxu0 %v443
        %v805 = vpop.f32.mrb[0].mxu0
        %v806 = vadd.f32 0.0, %v805
        %v807 = vpop.f32.mrb[0].mxu0
        %v808 = vadd.f32 0.0, %v807
        %v809 = vpop.f32.mrb[0].mxu0
        %v810 = vadd.f32 0.0, %v809
        %v811 = vpop.f32.mrb[0].mxu0
        %v812 = vadd.f32 0.0, %v811
        %813 = vdwg.mxu0
        %814 = vmatprep.subr.bf16.mxu0 %v676
        %815 = vmatpush1.bf16.msra.mxu0 %v675
        %816 = vmatprep.subr.bf16.mxu0 %v678
        %817 = vmatpush1.bf16.msra.mxu0 %v677
        %818 = vmatprep.subr.bf16.mxu0 %v680
        %819 = vmatpush1.bf16.msra.mxu0 %v679
        %820 = vmatprep.subr.bf16.mxu0 %v682
        %821 = vmatpush1.bf16.msra.mxu0 %v681
        %822 = vmatprep.subr.bf16.mxu0 %v684
        %823 = vmatpush1.bf16.msra.mxu0 %v683
        %824 = vmatprep.subr.bf16.mxu0 %v686
        %825 = vmatpush1.bf16.msra.mxu0 %v685
        %826 = vmatprep.subr.bf16.mxu0 %v688
        %827 = vmatpush1.bf16.msra.mxu0 %v687
        %828 = vmatprep.subr.bf16.mxu0 %v690
        %829 = vmatpush1.bf16.msra.mxu0 %v689
        %830 = vmatprep.subr.bf16.mxu0 %v692
        %831 = vmatpush1.bf16.msra.mxu0 %v691
        %832 = vmatprep.subr.bf16.mxu0 %v694
        %833 = vmatpush1.bf16.msra.mxu0 %v693
        %834 = vmatprep.subr.bf16.mxu0 %v696
        %835 = vmatpush1.bf16.msra.mxu0 %v695
        %836 = vmatprep.subr.bf16.mxu0 %v698
        %837 = vmatpush1.bf16.msra.mxu0 %v697
        %838 = vmatprep.subr.bf16.mxu0 %v700
        %839 = vmatpush1.bf16.msra.mxu0 %v699
        %840 = vmatprep.subr.bf16.mxu0 %v702
        %841 = vmatpush1.bf16.msra.mxu0 %v701
        %842 = vmatprep.subr.bf16.mxu0 %v704
        %843 = vmatpush1.bf16.msra.mxu0 %v703
        %844 = vmatprep.subr.bf16.mxu0 %v706
        %845 = vmatpush1.bf16.msra.mxu0 %v705
        %846 = vmatprep.mubr.bf16.mxu0 %v446
        %847 = vmatmul.mubr.bf16.gmra.mrb[0].mxu0 %v445
        %v848 = vpop.f32.mrb[0].mxu0
        %v849 = vadd.f32 %v806, %v848
        %v850 = vpop.f32.mrb[0].mxu0
        %v851 = vadd.f32 %v808, %v850
        %v852 = vpop.f32.mrb[0].mxu0
        %v853 = vadd.f32 %v810, %v852
        %v854 = vpop.f32.mrb[0].mxu0
        %v855 = vadd.f32 %v812, %v854
        %856 = vdwg.mxu0
        %v857 = vadd.f32 %v359, %v849
        %v858 = vadd.f32 %v360, %v851
        %v859 = vadd.f32 %v361, %v853
        %v860 = vadd.f32 %v362, %v855
        %861 = vst [vmem:[#allocation2] sm:$0xff] %v857
        %862 = vst [vmem:[#allocation2 + $0x8] sm:$0xff] %v858
        %863 = vst [vmem:[#allocation2 + $0x10] sm:$0xff] %v859
        %864 = vst [vmem:[#allocation2 + $0x18] sm:$0xff] %v860
        %p865 = scmp.eq.s32.totalorder %s23, 1
        // Predicated region
        $region76: #{convnet_forward.1} parent=66 // pred_check
          %p866 = pneg %p865
        $region77: #{convnet_forward.1} parent=66 // pred_check_branch
          %868 = sbr.rel (%p866) target = $region79
        $region78: #{convnet_forward.1} parent=66 // pred_region
          %v869 = vld [vmem:[#allocation2] sm:$0xff]
          %v870 = vld [vmem:[#allocation2 + $0x8] sm:$0xff]
          %v871 = vld [vmem:[#allocation2 + $0x10] sm:$0xff]
          %v872 = vld [vmem:[#allocation2 + $0x18] sm:$0xff]
          %v873 = vld [vmem:[%s2] sm:$0x3]
          %v875 = vlaneseq
          %v876 = vshrl.u32 %v875, 7
          %v877 = vsub.s32 0, %v876
          %v878 = vrot.slane %v873, %v877
          %v879 = vlaneseq
          %v880 = vshrl.u32 %v879, 7
          %v881 = vsub.s32 1, %v880
          %v882 = vrot.slane %v873, %v881
          %v885 = vadd.f32 %v869, %v878
          %v886 = vadd.f32 %v870, %v882
          %v887 = vadd.f32 %v871, %v878
          %v888 = vadd.f32 %v872, %v882
          %v889 = vmax.f32 %v885, 0.0
          %v890 = vmax.f32 %v886, 0.0
          %v891 = vmax.f32 %v887, 0.0
          %v892 = vmax.f32 %v888, 0.0
          %v893 = vpack.c.bf16 %v891, %v889
          %v894 = vpack.c.bf16 %v892, %v890
          %v895 = vld [vmem:[%s3] sm:$0xff]
          %v896 = vld [vmem:[%s3 + $0x8] sm:$0xff]
          %v897 = vld [vmem:[%s3 + $0x10] sm:$0xff]
          %v898 = vld [vmem:[%s3 + $0x18] sm:$0xff]
          %v899 = vld [vmem:[%s3 + $0x20] sm:$0xff]
          %v900 = vld [vmem:[%s3 + $0x28] sm:$0xff]
          %v901 = vld [vmem:[%s3 + $0x30] sm:$0xff]
          %v902 = vld [vmem:[%s3 + $0x38] sm:$0xff]
          %v903 = vld [vmem:[%s3 + $0x40] sm:$0xff]
          %v904 = vld [vmem:[%s3 + $0x48] sm:$0xff]
          %v905 = vld [vmem:[%s3 + $0x50] sm:$0xff]
          %v906 = vld [vmem:[%s3 + $0x58] sm:$0xff]
          %v907 = vld [vmem:[%s3 + $0x60] sm:$0xff]
          %v908 = vld [vmem:[%s3 + $0x68] sm:$0xff]
          %v909 = vld [vmem:[%s3 + $0x70] sm:$0xff]
          %v910 = vld [vmem:[%s3 + $0x78] sm:$0xff]
          %v911 = vld [vmem:[%s3 + $0x80] sm:$0xff]
          %v912 = vld [vmem:[%s3 + $0x88] sm:$0xff]
          %v913 = vld [vmem:[%s3 + $0x90] sm:$0xff]
          %v914 = vld [vmem:[%s3 + $0x98] sm:$0xff]
          %v915 = vld [vmem:[%s3 + $0xa0] sm:$0xff]
          %v916 = vld [vmem:[%s3 + $0xa8] sm:$0xff]
          %v917 = vld [vmem:[%s3 + $0xb0] sm:$0xff]
          %v918 = vld [vmem:[%s3 + $0xb8] sm:$0xff]
          %v919 = vld [vmem:[%s3 + $0xc0] sm:$0xff]
          %v920 = vld [vmem:[%s3 + $0xc8] sm:$0xff]
          %v921 = vld [vmem:[%s3 + $0xd0] sm:$0xff]
          %v922 = vld [vmem:[%s3 + $0xd8] sm:$0xff]
          %v923 = vld [vmem:[%s3 + $0xe0] sm:$0xff]
          %v924 = vld [vmem:[%s3 + $0xe8] sm:$0xff]
          %v925 = vld [vmem:[%s3 + $0xf0] sm:$0xff]
          %v926 = vld [vmem:[%s3 + $0xf8] sm:$0xff]
          %v927 = vld [vmem:[%s4] sm:$0x3]
          %v929 = vlaneseq
          %v930 = vshrl.u32 %v929, 7
          %v931 = vsub.s32 0, %v930
          %v932 = vrot.slane %v927, %v931
          %v933 = vlaneseq
          %v934 = vshrl.u32 %v933, 7
          %v935 = vsub.s32 1, %v934
          %v936 = vrot.slane %v927, %v935
          %v971 = vunpack.c.l.b16 %v895
          %v972 = vunpack.c.h.b16 %v895
          %v973 = vunpack.c.l.b16 %v896
          %v974 = vunpack.c.h.b16 %v896
          %v975 = vunpack.c.l.b16 %v897
          %v976 = vunpack.c.h.b16 %v897
          %v977 = vunpack.c.l.b16 %v898
          %v978 = vunpack.c.h.b16 %v898
          %v979 = vunpack.c.l.b16 %v899
          %v980 = vunpack.c.h.b16 %v899
          %v981 = vunpack.c.l.b16 %v900
          %v982 = vunpack.c.h.b16 %v900
          %v983 = vunpack.c.l.b16 %v901
          %v984 = vunpack.c.h.b16 %v901
          %v985 = vunpack.c.l.b16 %v902
          %v986 = vunpack.c.h.b16 %v902
          %v987 = vunpack.c.l.b16 %v903
          %v988 = vunpack.c.h.b16 %v903
          %v989 = vunpack.c.l.b16 %v904
          %v990 = vunpack.c.h.b16 %v904
          %v991 = vunpack.c.l.b16 %v905
          %v992 = vunpack.c.h.b16 %v905
          %v993 = vunpack.c.l.b16 %v906
          %v994 = vunpack.c.h.b16 %v906
          %v995 = vunpack.c.l.b16 %v907
          %v996 = vunpack.c.h.b16 %v907
          %v997 = vunpack.c.l.b16 %v908
          %v998 = vunpack.c.h.b16 %v908
          %v999 = vunpack.c.l.b16 %v909
          %v1000 = vunpack.c.h.b16 %v909
          %v1001 = vunpack.c.l.b16 %v910
          %v1002 = vunpack.c.h.b16 %v910
          %v1003 = vunpack.c.l.b16 %v911
          %v1004 = vunpack.c.h.b16 %v911
          %v1005 = vunpack.c.l.b16 %v912
          %v1006 = vunpack.c.h.b16 %v912
          %v1007 = vunpack.c.l.b16 %v913
          %v1008 = vunpack.c.h.b16 %v913
          %v1009 = vunpack.c.l.b16 %v914
          %v1010 = vunpack.c.h.b16 %v914
          %v1011 = vunpack.c.l.b16 %v915
          %v1012 = vunpack.c.h.b16 %v915
          %v1013 = vunpack.c.l.b16 %v916
          %v1014 = vunpack.c.h.b16 %v916
          %v1015 = vunpack.c.l.b16 %v917
          %v1016 = vunpack.c.h.b16 %v917
          %v1017 = vunpack.c.l.b16 %v918
          %v1018 = vunpack.c.h.b16 %v918
          %v1019 = vunpack.c.l.b16 %v919
          %v1020 = vunpack.c.h.b16 %v919
          %v1021 = vunpack.c.l.b16 %v920
          %v1022 = vunpack.c.h.b16 %v920
          %v1023 = vunpack.c.l.b16 %v921
          %v1024 = vunpack.c.h.b16 %v921
          %v1025 = vunpack.c.l.b16 %v922
          %v1026 = vunpack.c.h.b16 %v922
          %v1027 = vunpack.c.l.b16 %v923
          %v1028 = vunpack.c.h.b16 %v923
          %v1029 = vunpack.c.l.b16 %v924
          %v1030 = vunpack.c.h.b16 %v924
          %v1031 = vunpack.c.l.b16 %v925
          %v1032 = vunpack.c.h.b16 %v925
          %v1033 = vunpack.c.l.b16 %v926
          %v1034 = vunpack.c.h.b16 %v926
          %v1035 = vpack.c.b16 %v973, %v971
          %v1036 = vpack.c.b16 %v974, %v972
          %v1037 = vpack.c.b16 %v977, %v975
          %v1038 = vpack.c.b16 %v978, %v976
          %v1039 = vpack.c.b16 %v981, %v979
          %v1040 = vpack.c.b16 %v982, %v980
          %v1041 = vpack.c.b16 %v985, %v983
          %v1042 = vpack.c.b16 %v986, %v984
          %v1043 = vpack.c.b16 %v989, %v987
          %v1044 = vpack.c.b16 %v990, %v988
          %v1045 = vpack.c.b16 %v993, %v991
          %v1046 = vpack.c.b16 %v994, %v992
          %v1047 = vpack.c.b16 %v997, %v995
          %v1048 = vpack.c.b16 %v998, %v996
          %v1049 = vpack.c.b16 %v1001, %v999
          %v1050 = vpack.c.b16 %v1002, %v1000
          %v1051 = vpack.c.b16 %v1005, %v1003
          %v1052 = vpack.c.b16 %v1006, %v1004
          %v1053 = vpack.c.b16 %v1009, %v1007
          %v1054 = vpack.c.b16 %v1010, %v1008
          %v1055 = vpack.c.b16 %v1013, %v1011
          %v1056 = vpack.c.b16 %v1014, %v1012
          %v1057 = vpack.c.b16 %v1017, %v1015
          %v1058 = vpack.c.b16 %v1018, %v1016
          %v1059 = vpack.c.b16 %v1021, %v1019
          %v1060 = vpack.c.b16 %v1022, %v1020
          %v1061 = vpack.c.b16 %v1025, %v1023
          %v1062 = vpack.c.b16 %v1026, %v1024
          %v1063 = vpack.c.b16 %v1029, %v1027
          %v1064 = vpack.c.b16 %v1030, %v1028
          %v1065 = vpack.c.b16 %v1033, %v1031
          %v1066 = vpack.c.b16 %v1034, %v1032
          %1099 = vmatprep.subr.bf16.mxu0 %v1036
          %1100 = vmatpush1.bf16.msra.mxu0 %v1035
          %1101 = vmatprep.subr.bf16.mxu0 %v1038
          %1102 = vmatpush1.bf16.msra.mxu0 %v1037
          %1103 = vmatprep.subr.bf16.mxu0 %v1040
          %1104 = vmatpush1.bf16.msra.mxu0 %v1039
          %1105 = vmatprep.subr.bf16.mxu0 %v1042
          %1106 = vmatpush1.bf16.msra.mxu0 %v1041
          %1107 = vmatprep.subr.bf16.mxu0 %v1044
          %1108 = vmatpush1.bf16.msra.mxu0 %v1043
          %1109 = vmatprep.subr.bf16.mxu0 %v1046
          %1110 = vmatpush1.bf16.msra.mxu0 %v1045
          %1111 = vmatprep.subr.bf16.mxu0 %v1048
          %1112 = vmatpush1.bf16.msra.mxu0 %v1047
          %1113 = vmatprep.subr.bf16.mxu0 %v1050
          %1114 = vmatpush1.bf16.msra.mxu0 %v1049
          %1115 = vmatprep.subr.bf16.mxu0 %v1052
          %1116 = vmatpush1.bf16.msra.mxu0 %v1051
          %1117 = vmatprep.subr.bf16.mxu0 %v1054
          %1118 = vmatpush1.bf16.msra.mxu0 %v1053
          %1119 = vmatprep.subr.bf16.mxu0 %v1056
          %1120 = vmatpush1.bf16.msra.mxu0 %v1055
          %1121 = vmatprep.subr.bf16.mxu0 %v1058
          %1122 = vmatpush1.bf16.msra.mxu0 %v1057
          %1123 = vmatprep.subr.bf16.mxu0 %v1060
          %1124 = vmatpush1.bf16.msra.mxu0 %v1059
          %1125 = vmatprep.subr.bf16.mxu0 %v1062
          %1126 = vmatpush1.bf16.msra.mxu0 %v1061
          %1127 = vmatprep.subr.bf16.mxu0 %v1064
          %1128 = vmatpush1.bf16.msra.mxu0 %v1063
          %1129 = vmatprep.subr.bf16.mxu0 %v1066
          %1130 = vmatpush1.bf16.msra.mxu0 %v1065
          %1131 = vmatprep.mubr.bf16.mxu0 %v894
          %1132 = vmatmul.mubr.bf16.gmra.mrb[0].mxu0 %v893
          %v1133 = vpop.f32.mrb[0].mxu0
          %v1134 = vadd.f32 %v932, %v1133
          %v1135 = vpop.f32.mrb[0].mxu0
          %v1136 = vadd.f32 %v936, %v1135
          %v1137 = vpop.f32.mrb[0].mxu0
          %v1138 = vadd.f32 %v932, %v1137
          %v1139 = vpop.f32.mrb[0].mxu0
          %v1140 = vadd.f32 %v936, %v1139
          %1141 = vdwg.mxu0
          %v1142 = vmax.f32 %v1134, 0.0
          %v1143 = vmax.f32 %v1136, 0.0
          %v1144 = vmax.f32 %v1138, 0.0
          %v1145 = vmax.f32 %v1140, 0.0
          %v1146 = vpack.c.bf16 %v1144, %v1142
          %v1147 = vpack.c.bf16 %v1145, %v1143
          %v1148 = vld [vmem:[%s5] sm:$0xf]
          %v1149 = vld [vmem:[%s5 + $0x4] sm:$0xf]
          %v1150 = vld [vmem:[%s5 + $0x8] sm:$0xf]
          %v1151 = vld [vmem:[%s5 + $0xc] sm:$0xf]
          %v1152 = vld [vmem:[%s5 + $0x10] sm:$0xf]
          %v1153 = vld [vmem:[%s5 + $0x14] sm:$0xf]
          %v1154 = vld [vmem:[%s5 + $0x18] sm:$0xf]
          %v1155 = vld [vmem:[%s5 + $0x1c] sm:$0xf]
          %v1156 = vld [vmem:[%s5 + $0x20] sm:$0xf]
          %v1157 = vld [vmem:[%s5 + $0x24] sm:$0xf]
          %v1158 = vld [vmem:[%s5 + $0x28] sm:$0xf]
          %v1159 = vld [vmem:[%s5 + $0x2c] sm:$0xf]
          %v1160 = vld [vmem:[%s5 + $0x30] sm:$0xf]
          %v1161 = vld [vmem:[%s5 + $0x34] sm:$0xf]
          %v1162 = vld [vmem:[%s5 + $0x38] sm:$0xf]
          %v1163 = vld [vmem:[%s5 + $0x3c] sm:$0xf]
          %v1164 = vld [vmem:[%s5 + $0x40] sm:$0xf]
          %v1165 = vld [vmem:[%s5 + $0x44] sm:$0xf]
          %v1166 = vld [vmem:[%s5 + $0x48] sm:$0xf]
          %v1167 = vld [vmem:[%s5 + $0x4c] sm:$0xf]
          %v1168 = vld [vmem:[%s5 + $0x50] sm:$0xf]
          %v1169 = vld [vmem:[%s5 + $0x54] sm:$0xf]
          %v1170 = vld [vmem:[%s5 + $0x58] sm:$0xf]
          %v1171 = vld [vmem:[%s5 + $0x5c] sm:$0xf]
          %v1172 = vld [vmem:[%s5 + $0x60] sm:$0xf]
          %v1173 = vld [vmem:[%s5 + $0x64] sm:$0xf]
          %v1174 = vld [vmem:[%s5 + $0x68] sm:$0xf]
          %v1175 = vld [vmem:[%s5 + $0x6c] sm:$0xf]
          %v1176 = vld [vmem:[%s5 + $0x70] sm:$0xf]
          %v1177 = vld [vmem:[%s5 + $0x74] sm:$0xf]
          %v1178 = vld [vmem:[%s5 + $0x78] sm:$0xf]
          %v1179 = vld [vmem:[%s5 + $0x7c] sm:$0xf]
          %v1180 = vld [vmem:[%s6] sm:$0x1]
          %v1182 = vlaneseq
          %v1183 = vshrl.u32 %v1182, 7
          %v1184 = vsub.s32 0, %v1183
          %v1185 = vrot.slane %v1180, %v1184
          %v1219 = vunpack.c.l.b16 %v1148
          %v1220 = vunpack.c.l.b16 %v1149
          %v1221 = vunpack.c.l.b16 %v1150
          %v1222 = vunpack.c.l.b16 %v1151
          %v1223 = vunpack.c.l.b16 %v1152
          %v1224 = vunpack.c.l.b16 %v1153
          %v1225 = vunpack.c.l.b16 %v1154
          %v1226 = vunpack.c.l.b16 %v1155
          %v1227 = vunpack.c.l.b16 %v1156
          %v1228 = vunpack.c.l.b16 %v1157
          %v1229 = vunpack.c.l.b16 %v1158
          %v1230 = vunpack.c.l.b16 %v1159
          %v1231 = vunpack.c.l.b16 %v1160
          %v1232 = vunpack.c.l.b16 %v1161
          %v1233 = vunpack.c.l.b16 %v1162
          %v1234 = vunpack.c.l.b16 %v1163
          %v1235 = vunpack.c.l.b16 %v1164
          %v1236 = vunpack.c.l.b16 %v1165
          %v1237 = vunpack.c.l.b16 %v1166
          %v1238 = vunpack.c.l.b16 %v1167
          %v1239 = vunpack.c.l.b16 %v1168
          %v1240 = vunpack.c.l.b16 %v1169
          %v1241 = vunpack.c.l.b16 %v1170
          %v1242 = vunpack.c.l.b16 %v1171
          %v1243 = vunpack.c.l.b16 %v1172
          %v1244 = vunpack.c.l.b16 %v1173
          %v1245 = vunpack.c.l.b16 %v1174
          %v1246 = vunpack.c.l.b16 %v1175
          %v1247 = vunpack.c.l.b16 %v1176
          %v1248 = vunpack.c.l.b16 %v1177
          %v1249 = vunpack.c.l.b16 %v1178
          %v1250 = vunpack.c.l.b16 %v1179
          %v1251 = vpack.c.b16 %v1220, %v1219
          %v1252 = vpack.c.b16 %v1222, %v1221
          %v1253 = vpack.c.b16 %v1224, %v1223
          %v1254 = vpack.c.b16 %v1226, %v1225
          %v1255 = vpack.c.b16 %v1228, %v1227
          %v1256 = vpack.c.b16 %v1230, %v1229
          %v1257 = vpack.c.b16 %v1232, %v1231
          %v1258 = vpack.c.b16 %v1234, %v1233
          %v1259 = vpack.c.b16 %v1236, %v1235
          %v1260 = vpack.c.b16 %v1238, %v1237
          %v1261 = vpack.c.b16 %v1240, %v1239
          %v1262 = vpack.c.b16 %v1242, %v1241
          %v1263 = vpack.c.b16 %v1244, %v1243
          %v1264 = vpack.c.b16 %v1246, %v1245
          %v1265 = vpack.c.b16 %v1248, %v1247
          %v1266 = vpack.c.b16 %v1250, %v1249
          %1283 = vmatprep.subr.bf16.mxu0 0
          %1284 = vmatpush1.bf16.msra.mxu0 %v1251
          %1285 = vmatprep.subr.bf16.mxu0 0
          %1286 = vmatpush1.bf16.msra.mxu0 %v1252
          %1287 = vmatprep.subr.bf16.mxu0 0
          %1288 = vmatpush1.bf16.msra.mxu0 %v1253
          %1289 = vmatprep.subr.bf16.mxu0 0
          %1290 = vmatpush1.bf16.msra.mxu0 %v1254
          %1291 = vmatprep.subr.bf16.mxu0 0
          %1292 = vmatpush1.bf16.msra.mxu0 %v1255
          %1293 = vmatprep.subr.bf16.mxu0 0
          %1294 = vmatpush1.bf16.msra.mxu0 %v1256
          %1295 = vmatprep.subr.bf16.mxu0 0
          %1296 = vmatpush1.bf16.msra.mxu0 %v1257
          %1297 = vmatprep.subr.bf16.mxu0 0
          %1298 = vmatpush1.bf16.msra.mxu0 %v1258
          %1299 = vmatprep.subr.bf16.mxu0 0
          %1300 = vmatpush1.bf16.msra.mxu0 %v1259
          %1301 = vmatprep.subr.bf16.mxu0 0
          %1302 = vmatpush1.bf16.msra.mxu0 %v1260
          %1303 = vmatprep.subr.bf16.mxu0 0
          %1304 = vmatpush1.bf16.msra.mxu0 %v1261
          %1305 = vmatprep.subr.bf16.mxu0 0
          %1306 = vmatpush1.bf16.msra.mxu0 %v1262
          %1307 = vmatprep.subr.bf16.mxu0 0
          %1308 = vmatpush1.bf16.msra.mxu0 %v1263
          %1309 = vmatprep.subr.bf16.mxu0 0
          %1310 = vmatpush1.bf16.msra.mxu0 %v1264
          %1311 = vmatprep.subr.bf16.mxu0 0
          %1312 = vmatpush1.bf16.msra.mxu0 %v1265
          %1313 = vmatprep.subr.bf16.mxu0 0
          %1314 = vmatpush1.bf16.msra.mxu0 %v1266
          %1315 = vmatprep.mubr.bf16.mxu0 %v1147
          %1316 = vmatmul.mubr.bf16.gmra.mrb[0].mxu0 %v1146
          %v1317 = vpop.f32.mrb[0].mxu0
          %v1318 = vadd.f32 %v1185, %v1317
          %v1319 = vpop.f32.mrb[0].mxu0
          %v1320 = vpop.f32.mrb[0].mxu0
          %v1321 = vadd.f32 %v1185, %v1320
          %v1322 = vpop.f32.mrb[0].mxu0
          %1323 = vdwg.mxu0
          %1324 = vst [vmem:[%s348] sm:$0xff] %v1318
          %1325 = vst [vmem:[%s348 + $0x8] sm:$0xff] %v1321
        $region79: #{convnet_forward.1} parent=66 // pred_fallthru
          _
        %s1326 = smul.u32 2, %s22
        %p1327 = scmp.lt.s32.totalorder %s1326, 1
        %s1328 = scalar_select %p1327, %s1326, 1
        %s1329 = smul.addr %s1328, 8
        %s1330 = scalar_lea.vmem %s7, %s1329
        // Predicated region
        $region80: #{convnet_forward.1} parent=66 // pred_check
          %p1331 = pneg %p207
        $region81: #{convnet_forward.1} parent=66 // pred_check_branch
          %1333 = sbr.rel (%p1331) target = $region83
        $region82: #{convnet_forward.1} parent=66 // pred_region
          %s1334 = smul.u32 2, %s22
        $region83: #{convnet_forward.1} parent=66 // pred_fallthru
          _
        // Predicated region
        $region84: #{convnet_forward.1} parent=66 // pred_check
          %p1335 = pneg %p207
        $region85: #{convnet_forward.1} parent=66 // pred_check_branch
          %1337 = sbr.rel (%p1335) target = $region87
        $region86: #{convnet_forward.1} parent=66 // pred_region
          %s1338 = smul.u32 2, %s22
          %p1339 = scmp.lt.s32.totalorder %s1338, 1
          %s1340 = scalar_select %p1339, %s1338, 1
          %s1341 = smul.addr %s1340, 8
          %s1342 = scalar_lea.vmem %s7, %s1341
        $region87: #{convnet_forward.1} parent=66 // pred_fallthru
          _
      $region67: #{convnet_forward.1} parent=5 // pred_fallthru
        _
      %p1343 = scmp.le.s32.totalorder 2, %s13
      // Predicated region
      $region88: #{convnet_forward.1} parent=5 // pred_check
        %p1344 = pneg %p1343
      $region89: #{convnet_forward.1} parent=5 // pred_check_branch
        %1346 = sbr.rel (%p1344) target = $region91
      $region90: #{convnet_forward.1} parent=5 // pred_region
        %s1347 = ssub.s32 %s13, 2
      $region91: #{convnet_forward.1} parent=5 // pred_fallthru
        _
    $region6: #{convnet_forward.1} parent=1 // loop_footer
      %s17 = sadd.s32 1, %s13
    $region7: #{convnet_forward.1} parent=1 // loop_footer_branch
      %12 = sbr.rel target = $region3
    $region8: #{convnet_forward.1} parent=1 // loop_exit
      _

</llo_original>
